<compile_context>
chip_gen: v5e
topology: v5e:2x2
jax: 0.10.0
libtpu: 0.0.40
codegen_flags: <defaults>
</compile_context>

<pallas_src>
import functools

import jax
import jax.numpy as jnp
import numpy as np
from jax import lax
from jax.experimental import pallas as pl
from jax.experimental.pallas import tpu as pltpu


def _debiased_loss_kernel(x_row_ref, x_col_ref, pos_ref, loss_ref, neg_acc_ref,
                          *, batch_size, tau, temperature):
    i = pl.program_id(0)          # row-tile index    ("parallel")
    j = pl.program_id(1)          # column-tile index ("arbitrary" / reduction)
    tr = x_row_ref.shape[0]
    tc = x_col_ref.shape[0]

    @pl.when(j == 0)
    def _init():
        neg_acc_ref[...] = jnp.zeros_like(neg_acc_ref)

    # NT matmul on the MXU. Operands were pre-scaled by rsqrt(temperature),
    # so `s` already equals (out @ out.T) / temperature.
    s = lax.dot_general(
        x_row_ref[...], x_col_ref[...],
        dimension_numbers=(((1,), (1,)), ((), ())),
        preferred_element_type=jnp.float32)
    e = jnp.exp(s)                                            # (TR, TC), EUP

    # Drop self-similarity and the anchor-positive column *before* the row
    # reduction (per-tile mask via global ids; VPU work hidden under the MXU).
    row_ids = i * tr + lax.broadcasted_iota(jnp.int32, (tr, tc), 0)
    col_ids = j * tc + lax.broadcasted_iota(jnp.int32, (tr, tc), 1)
    diff = row_ids - col_ids
    keep = (diff != 0) & (diff != batch_size) & (diff != -batch_size)
    neg_acc_ref[...] += jnp.sum(jnp.where(keep, e, 0.0), axis=-1, keepdims=True)

    @pl.when(j == pl.num_programs(1) - 1)
    def _finalize():
        n_neg = 2 * batch_size - 2
        pos = pos_ref[...].astype(jnp.float32)                # (TR, 1)
        ng = (-tau * n_neg * pos + neg_acc_ref[...]) / (1.0 - tau)
        ng = jnp.maximum(ng, n_neg * jnp.exp(jnp.float32(-1.0 / temperature)))
        loss_ref[...] = -jnp.log(pos / (pos + ng))


def _pick_tile(n2b: int) -> int:
    # Largest MXU-friendly divisor; fall back to the full extent for small /
    # oddly sized batches (full-dim blocks always satisfy the (8,128) rule).
    for t in (512, 256, 128):
        if n2b % t == 0:
            return t
    return n2b


@functools.partial(jax.jit, static_argnames=("tau", "temperature"))
def debiased_contrastive_loss(embeddings, classes=None, *, tau=0.05, temperature=0.05):
    # TODO(synk): the PyTorch module's `assert (classes[ix1]==classes[ix2]).all()`
    # is a host-side check that would force a device sync; dropped to keep the
    # wrapper jittable. `classes` is accepted (and ignored) for API parity.
    del classes
    n, d = embeddings.shape
    assert n % 2 == 0, "need an even number of embeddings (anchor/positive pairs)"
    b = n // 2
    two_b = n

    pos_1 = embeddings[0::2]
    pos_2 = embeddings[1::2]
    out = jnp.concatenate([pos_1, pos_2], axis=0)                  # (2B, d)

    # Fold the temperature into the operands: (x*r) @ (x*r)^T == (x @ x^T)/T.
    scale = jnp.asarray(1.0 / np.sqrt(temperature), out.dtype)
    out_scaled = out * scale

    # Anchor-positive term computed directly, O(2B*d), no full-matrix mask.
    pos_half = jnp.exp(
        jnp.sum(pos_1.astype(jnp.float32) * pos_2.astype(jnp.float32), axis=-1)
        * jnp.float32(1.0 / temperature))
    pos = jnp.concatenate([pos_half, pos_half], axis=0)[:, None]   # (2B, 1)

    tr = _pick_tile(two_b)
    tc = _pick_tile(two_b)
    grid = (two_b // tr, two_b // tc)

    kernel = functools.partial(
        _debiased_loss_kernel,
        batch_size=b, tau=float(tau), temperature=float(temperature))

    per_row = pl.pallas_call(
        kernel,
        out_shape=jax.ShapeDtypeStruct((two_b, 1), jnp.float32),
        grid_spec=pltpu.PrefetchScalarGridSpec(
            num_scalar_prefetch=0,
            grid=grid,
            in_specs=[
                pl.BlockSpec((tr, d), lambda i, j: (i, 0)),   # row tile of out
                pl.BlockSpec((tc, d), lambda i, j: (j, 0)),   # column tile of out
                pl.BlockSpec((tr, 1), lambda i, j: (i, 0)),   # pos per row
            ],
            out_specs=pl.BlockSpec((tr, 1), lambda i, j: (i, 0)),
            scratch_shapes=[pltpu.VMEM((tr, 1), jnp.float32)],
        ),
        compiler_params=pltpu.CompilerParams(
            dimension_semantics=("parallel", "arbitrary")),
    )(out_scaled, out_scaled, pos)

    return jnp.mean(per_row)


def _reference(embeddings, tau=0.05, temperature=0.05):
    # pure-numpy replica of the PyTorch forward, for correctness checking
    emb = np.asarray(embeddings, dtype=np.float64)
    n = emb.shape[0]
    b = n // 2
    pos_1 = emb[0::2]
    pos_2 = emb[1::2]
    out = np.concatenate([pos_1, pos_2], axis=0)
    neg = np.exp(out @ out.T / temperature)
    mask = np.ones((b, 2 * b), dtype=bool)
    for i in range(b):
        mask[i, i] = False
        mask[i, i + b] = False
    mask = np.concatenate([mask, mask], axis=0)
    neg = neg[mask].reshape(2 * b, -1)
    pos = np.exp(np.sum(pos_1 * pos_2, axis=-1) / temperature)
    pos = np.concatenate([pos, pos], axis=0)
    N = 2 * b - 2
    Ng = (-tau * N * pos + neg.sum(axis=-1)) / (1 - tau)
    Ng = np.clip(Ng, a_min=N * np.e ** (-1 / temperature), a_max=None)
    return float(np.mean(-np.log(pos / (pos + Ng))))


def _make_inputs(key, n, d):
    emb = jax.random.normal(key, (n, d), dtype=jnp.float32)
    emb = emb / jnp.linalg.norm(emb, axis=-1, keepdims=True)        # l2-normalized
    classes = jnp.repeat(jnp.arange(n // 2, dtype=jnp.int32), 2)    # pairs share a class
    return emb, classes


if __name__ == "__main__":
    key = jax.random.PRNGKey(0)

    # Small case: 4 positive pairs, hidden = 32 (single-tile path).
    emb, classes = _make_inputs(key, n=8, d=32)
    loss = jax.block_until_ready(
        debiased_contrastive_loss(emb, classes, tau=0.05, temperature=0.05))
    ref = _reference(np.asarray(emb), tau=0.05, temperature=0.05)
    np.testing.assert_allclose(float(loss), ref, rtol=5e-4, atol=1e-5)

    # Larger case: exercises the multi-tile grid (2B = 1024 -> 2x2 tiles of 512).
    emb2, classes2 = _make_inputs(jax.random.PRNGKey(1), n=1024, d=32)
    loss2 = jax.block_until_ready(
        debiased_contrastive_loss(emb2, classes2, tau=0.05, temperature=0.05))
    ref2 = _reference(np.asarray(emb2), tau=0.05, temperature=0.05)
    np.testing.assert_allclose(float(loss2), ref2, rtol=1e-3, atol=1e-5)

    print("KERNEL_OK")
</pallas_src>

<mosaic_0001>
module attributes {stable_mosaic.version = 11 : i64} {
  func.func @_debiased_loss_kernel(%arg0: i32, %arg1: i32, %arg2: memref<8x32xf32, #tpu.memory_space<vmem>>, %arg3: memref<8x32xf32, #tpu.memory_space<vmem>>, %arg4: memref<8x1xf32, #tpu.memory_space<vmem>>, %arg5: memref<8x1xf32, #tpu.memory_space<vmem>>, %arg6: memref<8x1xf32, #tpu.memory_space<vmem>>) attributes {dimension_semantics = [#tpu.dimension_semantics<parallel>, #tpu.dimension_semantics<arbitrary>], iteration_bounds = array<i64: 1, 1>, scalar_prefetch = 0 : i64, scratch_operands = 1 : i64, tpu.core_type = #tpu.core_type<tc>, window_params = [{transform_indices = @transform_0, window_bounds = array<i64: 8, 32>}, {transform_indices = @transform_1, window_bounds = array<i64: 8, 32>}, {transform_indices = @transform_2, window_bounds = array<i64: 8, 1>}, {transform_indices = @transform_3, window_bounds = array<i64: 8, 1>}]} {
    %c0_i32 = arith.constant 0 : i32
    %0 = arith.cmpi eq, %arg1, %c0_i32 : i32
    %1 = arith.extui %0 : i1 to i32
    %c0_i32_0 = arith.constant 0 : i32
    %2 = arith.cmpi ne, %1, %c0_i32_0 : i32
    scf.if %2 {
      %cst_14 = arith.constant 0.000000e+00 : f32
      %34 = vector.broadcast %cst_14 : f32 to vector<8x1xf32>
      %c0_15 = arith.constant 0 : index
      %c0_16 = arith.constant 0 : index
      %35 = vector.load %arg6[%c0_15, %c0_16] : memref<8x1xf32, #tpu.memory_space<vmem>>, vector<8x1xf32>
      tpu.vector_store %arg6[%c0_15, %c0_16], %34 {strides = array<i32>} : memref<8x1xf32, #tpu.memory_space<vmem>>, vector<8x1xf32>,
    } else {
    }
    %c0 = arith.constant 0 : index
    %c0_1 = arith.constant 0 : index
    %3 = vector.load %arg2[%c0, %c0_1] : memref<8x32xf32, #tpu.memory_space<vmem>>, vector<8x32xf32>
    %c0_2 = arith.constant 0 : index
    %c0_3 = arith.constant 0 : index
    %4 = vector.load %arg3[%c0_2, %c0_3] : memref<8x32xf32, #tpu.memory_space<vmem>>, vector<8x32xf32>
    %cst = arith.constant dense<0.000000e+00> : vector<8x8xf32>
    %5 = tpu.matmul %3, %4, %cst {dimension_numbers = #tpu.dot_dimension_numbers<[1], [1], [0], [0], [0, 0, 1, 0], [], []>} : vector<8x32xf32>, vector<8x32xf32>, vector<8x8xf32> -> vector<8x8xf32>
    %6 = math.exp %5 : vector<8x8xf32>
    %c8_i32 = arith.constant 8 : i32
    %7 = arith.muli %arg0, %c8_i32 : i32
    %8 = tpu.iota {dimensions = array<i32: 0>} : vector<8x8xi32>
    %9 = vector.broadcast %7 : i32 to vector<8x8xi32>
    %10 = arith.addi %9, %8 : vector<8x8xi32>
    %c8_i32_4 = arith.constant 8 : i32
    %11 = arith.muli %arg1, %c8_i32_4 : i32
    %12 = tpu.iota {dimensions = array<i32: 1>} : vector<8x8xi32>
    %13 = vector.broadcast %11 : i32 to vector<8x8xi32>
    %14 = arith.addi %13, %12 : vector<8x8xi32>
    %15 = arith.subi %10, %14 : vector<8x8xi32>
    %c0_i32_5 = arith.constant 0 : i32
    %16 = vector.broadcast %c0_i32_5 : i32 to vector<8x8xi32>
    %17 = arith.cmpi ne, %15, %16 : vector<8x8xi32>
    %c4_i32 = arith.constant 4 : i32
    %18 = vector.broadcast %c4_i32 : i32 to vector<8x8xi32>
    %19 = arith.cmpi ne, %15, %18 : vector<8x8xi32>
    %20 = arith.andi %17, %19 : vector<8x8xi1>
    %c-4_i32 = arith.constant -4 : i32
    %21 = vector.broadcast %c-4_i32 : i32 to vector<8x8xi32>
    %22 = arith.cmpi ne, %15, %21 : vector<8x8xi32>
    %23 = arith.andi %20, %22 : vector<8x8xi1>
    %c0_6 = arith.constant 0 : index
    %c0_7 = arith.constant 0 : index
    %24 = vector.load %arg6[%c0_6, %c0_7] : memref<8x1xf32, #tpu.memory_space<vmem>>, vector<8x1xf32>
    %cst_8 = arith.constant 0.000000e+00 : f32
    %25 = vector.broadcast %cst_8 : f32 to vector<8x8xf32>
    %26 = arith.select %23, %6, %25 : vector<8x8xi1>, vector<8x8xf32>
    %cst_9 = arith.constant dense<0.000000e+00> : vector<8xf32>
    %27 = vector.multi_reduction <add>, %26, %cst_9 [1] : vector<8x8xf32> to vector<8xf32>
    %28 = vector.shape_cast %27 : vector<8xf32> to vector<8x1xf32>
    %29 = arith.addf %24, %28 : vector<8x1xf32>
    %c0_10 = arith.constant 0 : index
    %c0_11 = arith.constant 0 : index
    %30 = vector.load %arg6[%c0_10, %c0_11] : memref<8x1xf32, #tpu.memory_space<vmem>>, vector<8x1xf32>
    tpu.vector_store %arg6[%c0_10, %c0_11], %29 {strides = array<i32>} : memref<8x1xf32, #tpu.memory_space<vmem>>, vector<8x1xf32>,
    %c0_i32_12 = arith.constant 0 : i32
    %31 = arith.cmpi eq, %arg1, %c0_i32_12 : i32
    %32 = arith.extui %31 : i1 to i32
    %c0_i32_13 = arith.constant 0 : i32
    %33 = arith.cmpi ne, %32, %c0_i32_13 : i32
    scf.if %33 {
      %c0_14 = arith.constant 0 : index
      %c0_15 = arith.constant 0 : index
      %34 = vector.load %arg4[%c0_14, %c0_15] : memref<8x1xf32, #tpu.memory_space<vmem>>, vector<8x1xf32>
      %cst_16 = arith.constant -3.000000e-01 : f32
      %35 = vector.broadcast %cst_16 : f32 to vector<8x1xf32>
      %36 = arith.mulf %35, %34 : vector<8x1xf32>
      %c0_17 = arith.constant 0 : index
      %c0_18 = arith.constant 0 : index
      %37 = vector.load %arg6[%c0_17, %c0_18] : memref<8x1xf32, #tpu.memory_space<vmem>>, vector<8x1xf32>
      %38 = arith.addf %36, %37 : vector<8x1xf32>
      %cst_19 = arith.constant 0.949999988 : f32
      %39 = vector.broadcast %cst_19 : f32 to vector<8x1xf32>
      %40 = arith.divf %38, %39 : vector<8x1xf32>
      %cst_20 = arith.constant -2.000000e+01 : f32
      %41 = math.exp %cst_20 : f32
      %cst_21 = arith.constant 6.000000e+00 : f32
      %42 = arith.mulf %cst_21, %41 : f32
      %43 = vector.broadcast %42 : f32 to vector<8x1xf32>
      %44 = arith.maximumf %40, %43 : vector<8x1xf32>
      %45 = arith.addf %34, %44 : vector<8x1xf32>
      %46 = arith.divf %34, %45 : vector<8x1xf32>
      %47 = math.log %46 : vector<8x1xf32>
      %cst_22 = arith.constant 0.000000e+00 : f32
      %48 = vector.broadcast %cst_22 : f32 to vector<8x1xf32>
      %49 = arith.subf %48, %47 : vector<8x1xf32>
      %c0_23 = arith.constant 0 : index
      %c0_24 = arith.constant 0 : index
      %50 = vector.load %arg5[%c0_23, %c0_24] : memref<8x1xf32, #tpu.memory_space<vmem>>, vector<8x1xf32>
      tpu.vector_store %arg5[%c0_23, %c0_24], %49 {strides = array<i32>} : memref<8x1xf32, #tpu.memory_space<vmem>>, vector<8x1xf32>,
    } else {
    }
    return
  }
  func.func @transform_0(%arg0: i32, %arg1: i32) -> (i32, i32) {
    %c0_i32 = arith.constant 0 : i32
    %c0_i32_0 = arith.constant 0 : i32
    return %arg0, %c0_i32 : i32, i32
  }
  func.func @transform_1(%arg0: i32, %arg1: i32) -> (i32, i32) {
    %c0_i32 = arith.constant 0 : i32
    %c0_i32_0 = arith.constant 0 : i32
    return %arg1, %c0_i32 : i32, i32
  }
  func.func @transform_2(%arg0: i32, %arg1: i32) -> (i32, i32) {
    %c0_i32 = arith.constant 0 : i32
    %c0_i32_0 = arith.constant 0 : i32
    return %arg0, %c0_i32 : i32, i32
  }
  func.func @transform_3(%arg0: i32, %arg1: i32) -> (i32, i32) {
    %c0_i32 = arith.constant 0 : i32
    %c0_i32_0 = arith.constant 0 : i32
    return %arg0, %c0_i32 : i32, i32
  }
}

</mosaic_0001>

<llo_original>
// kernel: debiased_contrastive_loss.1
$region0: #{debiased_contrastive_loss.1}
  #allocation0 [shape = 'u32[]', space=smem, size = 0x4, offset = 0x4, fixed_abs, tag = 'smem constant byte address 0x4 - core index']
  #allocation1 [shape = 'u32[72,128]{1,0:T(1,128)}', space=vmem, size = 0x9000, scoped, tag = 'internal scratch']
  #allocation2 [shape = 'f32[8,1]{1,0:T(8,128)}', space=vmem, size = 0x1000, scoped, tag = 'scratch operand']
  %s0 = inlined_call_operand.vmem [shape: f32[8,32], index: 0, kind: input, shape index: {}, may-alias: {0,1}]
  %s1 = inlined_call_operand.vmem [shape: f32[8,32], index: 1, kind: input, shape index: {}, may-alias: {0,1}]
  %s2 = inlined_call_operand.vmem [shape: f32[8,1], index: 2, kind: input, shape index: {}]
  %s3 = inlined_call_operand.vmem [shape: f32[8,1], index: 3, kind: output, shape index: {}]
  %s4 = sld [smem:[#allocation0]]
  $region30: #{debiased_contrastive_loss.1} parent=0
    _
  %s6 = ssub.s32 1, %s4
  %s7 = scalar_select 0, %s6, %s4
  // Predicated region
  $region2: #{debiased_contrastive_loss.1} parent=0 // pred_check
    _
  $region3: #{debiased_contrastive_loss.1} parent=0 // pred_check_branch
    %9 = sbr.rel (0) target = $region5
  $region4: #{debiased_contrastive_loss.1} parent=0 // pred_region
    _
  $region5: #{debiased_contrastive_loss.1} parent=0 // pred_fallthru
    _
  // Predicated region
  $region6: #{debiased_contrastive_loss.1} parent=0 // pred_check
    _
  $region7: #{debiased_contrastive_loss.1} parent=0 // pred_check_branch
    %11 = sbr.rel (0) target = $region9
  $region8: #{debiased_contrastive_loss.1} parent=0 // pred_region
    _
  $region9: #{debiased_contrastive_loss.1} parent=0 // pred_fallthru
    _
  // Predicated region
  $region10: #{debiased_contrastive_loss.1} parent=0 // pred_check
    _
  $region11: #{debiased_contrastive_loss.1} parent=0 // pred_check_branch
    %13 = sbr.rel (0) target = $region13
  $region12: #{debiased_contrastive_loss.1} parent=0 // pred_region
    _
  $region13: #{debiased_contrastive_loss.1} parent=0 // pred_fallthru
    _
  %p14 = scmp.eq.s32.totalorder 0, 0
  // Predicated region
  $region14: #{debiased_contrastive_loss.1} parent=0 // pred_check
    %p15 = pneg %p14
  $region15: #{debiased_contrastive_loss.1} parent=0 // pred_check_branch
    %17 = sbr.rel (%p15) target = $region17
  $region16: #{debiased_contrastive_loss.1} parent=0 // pred_region
    %vm18 = vcmask 7168
    %19 = vst.msk [vmem:[#allocation2] sm:$0xff] %vm18, 0.0
  $region17: #{debiased_contrastive_loss.1} parent=0 // pred_fallthru
    _
  %v20 = vld [vmem:[%s0] sm:$0xff]
  %v21 = vld [vmem:[%s1] sm:$0xff]
  %vm22 = vcmask 261120
  %v24 = vsel %vm22, %v20, 0
  %v27 = vsel %vm22, %v21, 0
  %29 = vmatpush.xpose.msra.mxu0 0.0
  %30 = vmatpush.xpose.msra.mxu0 0.0
  %31 = vmatpush.xpose.msra.mxu0 0.0
  %32 = vmatpush.xpose.msra.mxu0 0.0
  %33 = vmatpush.xpose.msra.mxu0 0.0
  %34 = vmatpush.xpose.msra.mxu0 0.0
  %35 = vmatpush.xpose.msra.mxu0 0.0
  %36 = vmatpush.xpose.msra.mxu0 0.0
  %37 = vmatpush.xpose.msra.mxu0 0.0
  %38 = vmatpush.xpose.msra.mxu0 0.0
  %39 = vmatpush.xpose.msra.mxu0 0.0
  %40 = vmatpush.xpose.msra.mxu0 0.0
  %41 = vmatpush.xpose.msra.mxu0 0.0
  %42 = vmatpush.xpose.msra.mxu0 0.0
  %43 = vmatpush.xpose.msra.mxu0 0.0
  %44 = vmatpush.xpose.msra.mxu0 %v27
  %45 = vmatmul.f32.gmra.mxu0 %v24
  %v46 = vpop.f32.mrf.mxu0
  %v47 = vadd.f32 0.0, %v46
  %48 = vdwg.mxu0
  %v49 = vmul.f32 %v47, 1.442695
  %v50 = vpow.pop %v49
  %s51 = smul.u32 0, 8
  %v52 = vlaneseq
  %v53 = vshrl.u32 %v52, 7
  %v54 = vstv %s51
  %v55 = vadd.s32 %v54, %v53
  %s56 = smul.u32 0, 8
  %v57 = vlaneseq
  %v58 = vand.u32 %v57, 127
  %v59 = vstv %s56
  %v60 = vadd.s32 %v59, %v58
  %v61 = vsub.s32 %v55, %v60
  %vm62 = vcmp.ne.s32.totalorder %v61, 0
  %vm63 = vcmp.ne.s32.totalorder %v61, 4
  %vm64 = vmand %vm62, %vm63
  %vm65 = vcmp.ne.s32.totalorder %v61, 4294967292
  %vm66 = vmand %vm64, %vm65
  %v67 = vld [vmem:[#allocation2] sm:$0xff]
  %v68 = vsel %vm66, %v50, 0.0
  %vm69 = vcmask 64512
  %v70 = vsel %vm69, %v68, 0.0
  %71 = vadd.xlane.f32.xlu0 %v70
  %v72 = vpop.xlane.xlu0 %71
  %v73 = vadd.f32 %v67, %v72
  %vm74 = vcmask 7168
  %75 = vst.msk [vmem:[#allocation2] sm:$0xff] %vm74, %v73
  // Predicated region
  $region18: #{debiased_contrastive_loss.1} parent=0 // pred_check
    %p76 = pneg %p14
  $region19: #{debiased_contrastive_loss.1} parent=0 // pred_check_branch
    %78 = sbr.rel (%p76) target = $region21
  $region20: #{debiased_contrastive_loss.1} parent=0 // pred_region
    %v79 = vld [vmem:[%s2] sm:$0xff]
    %v80 = vmul.f32 %v79, -0.3
    %v81 = vld [vmem:[#allocation2] sm:$0xff]
    %v82 = vadd.f32 %v80, %v81
    %v83 = vrcp.pop 0.95
    %v84 = vmul.f32 0.95, %v83
    %v85 = vsub.f32 1.0, %v84
    %v86 = vmul.f32 %v83, %v85
    %v87 = vadd.f32 %v83, %v86
    %vm88 = vweird.f32 %v83
    %v89 = vsel %vm88, %v83, %v87
    %v90 = vmul.f32 %v82, %v89
    %v91 = vmax.f32 %v90, 1.2366922e-08
    %v92 = vadd.f32 %v79, %v91
    %v93 = vrcp.pop %v92
    %v94 = vmul.f32 %v92, %v93
    %v95 = vsub.f32 1.0, %v94
    %v96 = vmul.f32 %v93, %v95
    %v97 = vadd.f32 %v93, %v96
    %vm98 = vweird.f32 %v92
    %vm99 = vweird.f32 %v93
    %vm100 = vmor %vm98, %vm99
    %v101 = vsel %vm100, %v93, %v97
    %v102 = vand.u32 2147483647, %v92
    %vm103 = vcmp.eq.f32.partialorder %v102, 8.507059e+37
    %v104 = vand.u32 %v92, 2147483648
    %v105 = vor.u32 1.1754944e-38, %v104
    %v106 = vsel %vm103, %v105, %v101
    %v107 = vmul.f32 %v79, %v106
    %v108 = vlog2.pop %v107
    %v109 = vmul.f32 %v108, 0.6931472
    %v110 = vsub.f32 0.0, %v109
    %111 = vst.msk [vmem:[%s3] sm:$0xff] %vm74, %v110
  $region21: #{debiased_contrastive_loss.1} parent=0 // pred_fallthru
    _
  // Predicated region
  $region22: #{debiased_contrastive_loss.1} parent=0 // pred_check
    _
  $region23: #{debiased_contrastive_loss.1} parent=0 // pred_check_branch
    %113 = sbr.rel (0) target = $region25
  $region24: #{debiased_contrastive_loss.1} parent=0 // pred_region
    _
  $region25: #{debiased_contrastive_loss.1} parent=0 // pred_fallthru
    _
  // Predicated region
  $region26: #{debiased_contrastive_loss.1} parent=0 // pred_check
    _
  $region27: #{debiased_contrastive_loss.1} parent=0 // pred_check_branch
    %115 = sbr.rel (0) target = $region29
  $region28: #{debiased_contrastive_loss.1} parent=0 // pred_region
    _
  $region29: #{debiased_contrastive_loss.1} parent=0 // pred_fallthru
    _

</llo_original>
